<compile_context>
chip_gen: v7x
topology: tpu7x:2x2x1
jax: 0.10.0
libtpu: 0.0.40
codegen_flags: <defaults>
</compile_context>

<pallas_src>
import functools

import jax
import jax.numpy as jnp
from jax.experimental import pallas as pl
from jax.experimental.pallas import tpu as pltpu

LEAKY_SLOPE = 0.01  # torch.nn.functional.leaky_relu default
LANE = 128
SUBLANE = 8


def _round_up(n, m):
    return ((n + m - 1) // m) * m


def _fused_mlp_kernel(*refs, num_layers):
    """Fused MLP: layer0, then (leaky_relu -> layer_i) for i >= 1.

    refs = (x_ref, w0_ref, b0_ref, w1_ref, b1_ref, ..., o_ref)
    x_ref: (TB, In); w_i: (F_i, F_{i+1}_pad); b_i: (1, F_{i+1}_pad); o_ref: (TB, Out_pad).
    Hidden/output dims padded (with zeros) to multiples of 128.
    """
    x_ref = refs[0]
    o_ref = refs[-1]
    wb = refs[1:-1]

    x = x_ref[...].astype(jnp.float32)
    for li in range(num_layers):
        if li > 0:
            # leaky_relu: max(x, a*x) == where(x > 0, x, a*x) for 0 < a < 1.
            x = jnp.maximum(x, LEAKY_SLOPE * x)
        w = wb[2 * li][...]
        b = wb[2 * li + 1][...].astype(jnp.float32)
        lhs = x if w.dtype == x.dtype else x.astype(w.dtype)  # bf16 MXU path if weights are bf16
        x = jnp.dot(lhs, w, preferred_element_type=jnp.float32) + b
    o_ref[...] = x.astype(o_ref.dtype)


def prepare_params(params, *, dtype=jnp.float32):
    """Pad parameters ONCE (hoisted out of the per-forward path).

    params: list of (w, b) with w (in, out) == PyTorch weight transposed, b (1, out).
    Layer-0 keeps its un-padded input dim (x is consumed un-padded); all output dims
    (and subsequent input dims) are zero-padded to the 128-lane width.
    Pass dtype=jnp.bfloat16 to halve weight DMA/VMEM (f32 accumulation is preserved).
    Returns (padded_params, dims, padded_dims).
    """
    dims = [params[0][0].shape[0]] + [w.shape[1] for w, _ in params]
    pdims = [dims[0]] + [_round_up(d, LANE) for d in dims[1:]]
    padded = []
    for li, (w, b) in enumerate(params):
        fin, fout = w.shape
        w_p = jnp.pad(w, ((0, pdims[li] - fin), (0, pdims[li + 1] - fout))).astype(dtype)
        b_p = jnp.pad(b, ((0, 0), (0, pdims[li + 1] - fout))).astype(dtype)
        padded.append((w_p, b_p))
    return padded, tuple(dims), tuple(pdims)


def nn_forward(x, prepared, *, block_b=256):
    """Reproduces NN.forward with a single fused pallas_call.

    x: (B, in_size) f32.  prepared: output of prepare_params (padded once, reused).
    """
    padded_params, dims, pdims = prepared
    B, in_size = x.shape
    assert in_size == dims[0], "input feature size mismatch"
    out_size = dims[-1]
    out_pad = pdims[-1]
    num_layers = len(padded_params)

    # Batch tiling: multiple of 8 sublanes; split into >=2 grid steps whenever there is
    # enough work (so ("parallel",) actually shards on v7x's 2 TCs) while keeping the
    # tail padding small (<= 8 wasted rows), capped at block_b rows per tile.
    B_pad = _round_up(B, SUBLANE)
    tb = min(block_b, _round_up(max(B_pad // 2, SUBLANE), SUBLANE))
    B_pad = _round_up(B_pad, tb)
    grid = (B_pad // tb,)

    x_p = x if B_pad == B else jnp.pad(x, ((0, B_pad - B), (0, 0)))

    # Input x: no feature padding (last block dim == full array dim is legal).
    in_specs = [pl.BlockSpec((tb, in_size), lambda i: (i, 0))]
    for li in range(num_layers):
        fin_p, fout_p = pdims[li], pdims[li + 1]
        # Weights/biases: same block every grid step -> resident in VMEM.
        in_specs.append(pl.BlockSpec((fin_p, fout_p), lambda i: (0, 0)))
        in_specs.append(pl.BlockSpec((1, fout_p), lambda i: (0, 0)))
    out_specs = pl.BlockSpec((tb, out_pad), lambda i: (i, 0))

    # VMEM guard: resident weights/biases + streamed x/out tiles, all double-buffered
    # by the default pipeline. Conservatively capped at 64 MiB (v7x physical VMEM);
    # K/N-tile the weights instead of holding them resident once hidden dims >~ 2048.
    itemsize = jnp.dtype(padded_params[0][0].dtype).itemsize
    resident = sum(w.size + b.size for w, b in padded_params) * itemsize
    streamed = tb * (in_size + out_pad) * x.dtype.itemsize
    vmem_est = 2 * (resident + streamed) + (1 << 20)
    vmem_limit = int(min(64 * 2**20, max(32 * 2**20, 2 * vmem_est)))

    wb_flat = [a for pair in padded_params for a in pair]
    kernel = functools.partial(_fused_mlp_kernel, num_layers=num_layers)
    out_p = pl.pallas_call(
        kernel,
        out_shape=jax.ShapeDtypeStruct((B_pad, out_pad), x.dtype),
        grid=grid,
        in_specs=in_specs,
        out_specs=out_specs,
        compiler_params=pltpu.CompilerParams(
            # Batch tiles are independent -> shard across TensorCores on v7x.
            dimension_semantics=("parallel",),
            vmem_limit_bytes=vmem_limit,
        ),
    )(x_p, *wb_flat)

    return out_p[:B, :out_size]


def init_nn_params(key, in_size, out_size, layers):
    """Deterministic init mimicking nn.Linear defaults: U(-1/sqrt(fan_in), 1/sqrt(fan_in))."""
    sizes = [in_size] + list(layers) + [out_size]
    params = []
    for fin, fout in zip(sizes[:-1], sizes[1:]):
        key, kw, kb = jax.random.split(key, 3)
        bound = 1.0 / jnp.sqrt(jnp.float32(fin))
        # stored as (in, out) == PyTorch weight (out, in) transposed
        w = jax.random.uniform(kw, (fin, fout), jnp.float32, -bound, bound)
        b = jax.random.uniform(kb, (1, fout), jnp.float32, -bound, bound)
        params.append((w, b))
    return params


def nn_reference(x, params):
    """Pure-JAX reference for correctness check (mirrors torch leaky_relu semantics)."""
    w0, b0 = params[0]
    x = x @ w0 + b0
    for w, b in params[1:]:
        x = jnp.where(x > 0, x, LEAKY_SLOPE * x)
        x = x @ w + b
    return x


if __name__ == "__main__":
    key = jax.random.PRNGKey(0)
    k_in1, k_in2, k_par = jax.random.split(key, 3)

    in_size = 32       # e.g. observation size
    hidden = [64, 64]  # layers=[64, 64]
    out_size = 16      # e.g. action size

    params = init_nn_params(k_par, in_size, out_size, hidden)
    prepared = prepare_params(params)  # padded ONCE, reused across forward calls

    # Small batch (single grid step).
    x1 = jax.random.normal(k_in1, (8, in_size), jnp.float32)
    out1 = jax.block_until_ready(nn_forward(x1, prepared))
    ref1 = nn_reference(x1, params)
    assert out1.shape == (8, out_size)
    assert jnp.allclose(out1, ref1, atol=1e-4, rtol=1e-4), "mismatch vs reference (B=8)"

    # Ragged batch (2 grid steps + padded tail rows), same prepared params.
    x2 = jax.random.normal(k_in2, (24, in_size), jnp.float32)
    out2 = jax.block_until_ready(nn_forward(x2, prepared))
    ref2 = nn_reference(x2, params)
    assert out2.shape == (24, out_size)
    assert jnp.allclose(out2, ref2, atol=1e-4, rtol=1e-4), "mismatch vs reference (B=24)"

    print("KERNEL_OK")
</pallas_src>

<mosaic_0001>
module attributes {stable_mosaic.version = 11 : i64} {
  func.func @_fused_mlp_kernel(%arg0: i32, %arg1: memref<8x32xf32, #tpu.memory_space<vmem>>, %arg2: memref<32x128xf32, #tpu.memory_space<vmem>>, %arg3: memref<1x128xf32, #tpu.memory_space<vmem>>, %arg4: memref<128x128xf32, #tpu.memory_space<vmem>>, %arg5: memref<1x128xf32, #tpu.memory_space<vmem>>, %arg6: memref<128x128xf32, #tpu.memory_space<vmem>>, %arg7: memref<1x128xf32, #tpu.memory_space<vmem>>, %arg8: memref<8x128xf32, #tpu.memory_space<vmem>>) attributes {dimension_semantics = [#tpu.dimension_semantics<parallel>], iteration_bounds = array<i64: 1>, scalar_prefetch = 0 : i64, scratch_operands = 0 : i64, tpu.core_type = #tpu.core_type<tc>, window_params = [{transform_indices = @transform_0, window_bounds = array<i64: 8, 32>}, {pipeline_mode = #tpu.pipeline_mode<synchronous>, transform_indices = @transform_1, window_bounds = array<i64: 32, 128>}, {pipeline_mode = #tpu.pipeline_mode<synchronous>, transform_indices = @transform_2, window_bounds = array<i64: 1, 128>}, {pipeline_mode = #tpu.pipeline_mode<synchronous>, transform_indices = @transform_3, window_bounds = array<i64: 128, 128>}, {pipeline_mode = #tpu.pipeline_mode<synchronous>, transform_indices = @transform_4, window_bounds = array<i64: 1, 128>}, {pipeline_mode = #tpu.pipeline_mode<synchronous>, transform_indices = @transform_5, window_bounds = array<i64: 128, 128>}, {pipeline_mode = #tpu.pipeline_mode<synchronous>, transform_indices = @transform_6, window_bounds = array<i64: 1, 128>}, {transform_indices = @transform_7, window_bounds = array<i64: 8, 128>}]} {
    %c0 = arith.constant 0 : index
    %c0_0 = arith.constant 0 : index
    %0 = vector.load %arg1[%c0, %c0_0] : memref<8x32xf32, #tpu.memory_space<vmem>>, vector<8x32xf32>
    %c0_1 = arith.constant 0 : index
    %c0_2 = arith.constant 0 : index
    %1 = vector.load %arg2[%c0_1, %c0_2] : memref<32x128xf32, #tpu.memory_space<vmem>>, vector<32x128xf32>
    %c0_3 = arith.constant 0 : index
    %c0_4 = arith.constant 0 : index
    %2 = vector.load %arg3[%c0_3, %c0_4] : memref<1x128xf32, #tpu.memory_space<vmem>>, vector<1x128xf32>
    %cst = arith.constant dense<0.000000e+00> : vector<8x128xf32>
    %3 = tpu.matmul %0, %1, %cst {dimension_numbers = #tpu.dot_dimension_numbers<[1], [0], [0], [1], [0, 0, 1, 1], [], []>} : vector<8x32xf32>, vector<32x128xf32>, vector<8x128xf32> -> vector<8x128xf32>
    %4 = vector.broadcast %2 : vector<1x128xf32> to vector<8x128xf32>
    %5 = arith.addf %3, %4 : vector<8x128xf32>
    %cst_5 = arith.constant 0.00999999977 : f32
    %6 = vector.broadcast %cst_5 : f32 to vector<8x128xf32>
    %7 = arith.mulf %6, %5 : vector<8x128xf32>
    %8 = arith.maximumf %5, %7 : vector<8x128xf32>
    %c0_6 = arith.constant 0 : index
    %c0_7 = arith.constant 0 : index
    %9 = vector.load %arg4[%c0_6, %c0_7] : memref<128x128xf32, #tpu.memory_space<vmem>>, vector<128x128xf32>
    %c0_8 = arith.constant 0 : index
    %c0_9 = arith.constant 0 : index
    %10 = vector.load %arg5[%c0_8, %c0_9] : memref<1x128xf32, #tpu.memory_space<vmem>>, vector<1x128xf32>
    %cst_10 = arith.constant dense<0.000000e+00> : vector<8x128xf32>
    %11 = tpu.matmul %8, %9, %cst_10 {dimension_numbers = #tpu.dot_dimension_numbers<[1], [0], [0], [1], [0, 0, 1, 1], [], []>} : vector<8x128xf32>, vector<128x128xf32>, vector<8x128xf32> -> vector<8x128xf32>
    %12 = vector.broadcast %10 : vector<1x128xf32> to vector<8x128xf32>
    %13 = arith.addf %11, %12 : vector<8x128xf32>
    %cst_11 = arith.constant 0.00999999977 : f32
    %14 = vector.broadcast %cst_11 : f32 to vector<8x128xf32>
    %15 = arith.mulf %14, %13 : vector<8x128xf32>
    %16 = arith.maximumf %13, %15 : vector<8x128xf32>
    %c0_12 = arith.constant 0 : index
    %c0_13 = arith.constant 0 : index
    %17 = vector.load %arg6[%c0_12, %c0_13] : memref<128x128xf32, #tpu.memory_space<vmem>>, vector<128x128xf32>
    %c0_14 = arith.constant 0 : index
    %c0_15 = arith.constant 0 : index
    %18 = vector.load %arg7[%c0_14, %c0_15] : memref<1x128xf32, #tpu.memory_space<vmem>>, vector<1x128xf32>
    %cst_16 = arith.constant dense<0.000000e+00> : vector<8x128xf32>
    %19 = tpu.matmul %16, %17, %cst_16 {dimension_numbers = #tpu.dot_dimension_numbers<[1], [0], [0], [1], [0, 0, 1, 1], [], []>} : vector<8x128xf32>, vector<128x128xf32>, vector<8x128xf32> -> vector<8x128xf32>
    %20 = vector.broadcast %18 : vector<1x128xf32> to vector<8x128xf32>
    %21 = arith.addf %19, %20 : vector<8x128xf32>
    %c0_17 = arith.constant 0 : index
    %c0_18 = arith.constant 0 : index
    %22 = vector.load %arg8[%c0_17, %c0_18] : memref<8x128xf32, #tpu.memory_space<vmem>>, vector<8x128xf32>
    tpu.vector_store %arg8[%c0_17, %c0_18], %21 {strides = array<i32>} : memref<8x128xf32, #tpu.memory_space<vmem>>, vector<8x128xf32>,
    return
  }
  func.func @transform_0(%arg0: i32) -> (i32, i32) {
    %c0_i32 = arith.constant 0 : i32
    %c0_i32_0 = arith.constant 0 : i32
    return %arg0, %c0_i32 : i32, i32
  }
  func.func @transform_1(%arg0: i32) -> (i32, i32) {
    %c0_i32 = arith.constant 0 : i32
    %c0_i32_0 = arith.constant 0 : i32
    %c0_i32_1 = arith.constant 0 : i32
    return %c0_i32, %c0_i32_0 : i32, i32
  }
  func.func @transform_2(%arg0: i32) -> (i32, i32) {
    %c0_i32 = arith.constant 0 : i32
    %c0_i32_0 = arith.constant 0 : i32
    %c0_i32_1 = arith.constant 0 : i32
    return %c0_i32, %c0_i32_0 : i32, i32
  }
  func.func @transform_3(%arg0: i32) -> (i32, i32) {
    %c0_i32 = arith.constant 0 : i32
    %c0_i32_0 = arith.constant 0 : i32
    %c0_i32_1 = arith.constant 0 : i32
    return %c0_i32, %c0_i32_0 : i32, i32
  }
  func.func @transform_4(%arg0: i32) -> (i32, i32) {
    %c0_i32 = arith.constant 0 : i32
    %c0_i32_0 = arith.constant 0 : i32
    %c0_i32_1 = arith.constant 0 : i32
    return %c0_i32, %c0_i32_0 : i32, i32
  }
  func.func @transform_5(%arg0: i32) -> (i32, i32) {
    %c0_i32 = arith.constant 0 : i32
    %c0_i32_0 = arith.constant 0 : i32
    %c0_i32_1 = arith.constant 0 : i32
    return %c0_i32, %c0_i32_0 : i32, i32
  }
  func.func @transform_6(%arg0: i32) -> (i32, i32) {
    %c0_i32 = arith.constant 0 : i32
    %c0_i32_0 = arith.constant 0 : i32
    %c0_i32_1 = arith.constant 0 : i32
    return %c0_i32, %c0_i32_0 : i32, i32
  }
  func.func @transform_7(%arg0: i32) -> (i32, i32) {
    %c0_i32 = arith.constant 0 : i32
    %c0_i32_0 = arith.constant 0 : i32
    return %arg0, %c0_i32 : i32, i32
  }
}

</mosaic_0001>

<llo_original>
// kernel: tpu_custom_call.1
$region0: #{tpu_custom_call.1}
  #allocation0 [shape = 'u32[]', space=smem, size = 0x4, offset = 0x4, fixed_abs, tag = 'smem constant byte address 0x4 - core index']
  #allocation1 [shape = 'u32[144,128]{1,0:T(1,128)}', space=vmem, size = 0x12000, scoped, tag = 'internal scratch']
  %s0 = inlined_call_operand.hbm [shape: f32[8,32], index: 0, kind: input, shape index: {}]
  %s1 = inlined_call_operand.hbm [shape: f32[32,128], index: 1, kind: input, shape index: {}]
  %s2 = inlined_call_operand.vmem [shape: f32[1,128], index: 2, kind: input, shape index: {}]
  %s3 = inlined_call_operand.hbm [shape: f32[128,128], index: 3, kind: input, shape index: {}]
  %s4 = inlined_call_operand.vmem [shape: f32[1,128], index: 4, kind: input, shape index: {}]
  %s5 = inlined_call_operand.hbm [shape: f32[128,128], index: 5, kind: input, shape index: {}]
  %s6 = inlined_call_operand.vmem [shape: f32[1,128], index: 6, kind: input, shape index: {}]
  %s7 = inlined_call_operand.hbm [shape: f32[8,128], index: 7, kind: output, shape index: {}]
  %s8 = sld [smem:[#allocation0]]
  $region54: #{tpu_custom_call.1} parent=0
    _
  %s10 = ssub.s32 1, %s8
  %s11 = scalar_select 0, %s10, %s8
  $region1: #{tpu_custom_call.1} parent=0
    #allocation2 [shape = 'u8[4096]{0}', space=vmem, size = 0x1000, scoped, tag = 'input window, operand 0, single buffered']
    #allocation3 [shape = 's32[1]{0}', space=sflag, size = 0x4, scoped, tag = 'scoped memory for tpu_custom_call.1']
    #allocation4 [shape = 's32[1]{0}', space=sflag, size = 0x4, scoped, tag = 'scoped memory for tpu_custom_call.1']
    #allocation5 [shape = 'u8[16384]{0}', space=vmem, size = 0x4000, scoped, tag = 'input window, operand 1, single buffered']
    #allocation6 [shape = 's32[1]{0}', space=sflag, size = 0x4, scoped, tag = 'scoped memory for tpu_custom_call.1']
    #allocation7 [shape = 'u8[65536]{0}', space=vmem, size = 0x10000, scoped, tag = 'input window, operand 3, single buffered']
    #allocation8 [shape = 'u8[65536]{0}', space=vmem, size = 0x10000, scoped, tag = 'input window, operand 5, single buffered']
    #allocation9 [shape = 's32[1]{0}', space=sflag, size = 0x4, scoped, tag = 'scoped memory for tpu_custom_call.1']
    #allocation10 [shape = 'u8[4096]{0}', space=vmem, size = 0x1000, scoped, tag = 'output window, operand 0, single buffered']
    %12 = vsyncpa [#allocation3], 0
    %13 = vsyncpa [#allocation6], 0
    %14 = vsyncpa [#allocation9], 0
    %15 = vsyncpa [#allocation4], 0
    // Predicated region
    $region2: #{tpu_custom_call.1} parent=1 // pred_check
      _
    $region3: #{tpu_custom_call.1} parent=1 // pred_check_branch
      %17 = sbr.rel (0) target = $region5
    $region4: #{tpu_custom_call.1} parent=1 // pred_region
      %s19 = ssub.s32 128, 128
      %20 = vsyncadd [#allocation3], %s19
      %s22 = sshll.u32 [#allocation2], 4
      %s23 = int_to_ptr.vmem [resolvable:$true] %s22
      %25 = dma.hbm_to_vmem [thread:$0]  %s0, 128, %s23, [#allocation3]
    $region5: #{tpu_custom_call.1} parent=1 // pred_fallthru
      _
    // Predicated region
    $region6: #{tpu_custom_call.1} parent=1 // pred_check
      _
    $region7: #{tpu_custom_call.1} parent=1 // pred_check_branch
      %27 = sbr.rel (0) target = $region9
    $region8: #{tpu_custom_call.1} parent=1 // pred_region
      %s29 = ssub.s32 512, 512
      %30 = vsyncadd [#allocation6], %s29
      %s31 = sshll.u32 [#allocation5], 4
      %s32 = int_to_ptr.vmem [resolvable:$true] %s31
      %37 = dma.hbm_to_vmem [thread:$0]  %s1, 512, %s32, [#allocation6], 128, 128, 8
    $region9: #{tpu_custom_call.1} parent=1 // pred_fallthru
      _
    // Predicated region
    $region10: #{tpu_custom_call.1} parent=1 // pred_check
      _
    $region11: #{tpu_custom_call.1} parent=1 // pred_check_branch
      %39 = sbr.rel (0) target = $region13
    $region12: #{tpu_custom_call.1} parent=1 // pred_region
      _
    $region13: #{tpu_custom_call.1} parent=1 // pred_fallthru
      _
    // Predicated region
    $region14: #{tpu_custom_call.1} parent=1 // pred_check
      _
    $region15: #{tpu_custom_call.1} parent=1 // pred_check_branch
      %41 = sbr.rel (0) target = $region17
    $region16: #{tpu_custom_call.1} parent=1 // pred_region
      %s43 = ssub.s32 2048, 2048
      %44 = vsyncadd [#allocation6], %s43
      %s45 = sshll.u32 [#allocation7], 4
      %s46 = int_to_ptr.vmem [resolvable:$true] %s45
      %51 = dma.hbm_to_vmem [thread:$0]  %s3, 2048, %s46, [#allocation6], 128, 128, 8
    $region17: #{tpu_custom_call.1} parent=1 // pred_fallthru
      _
    // Predicated region
    $region18: #{tpu_custom_call.1} parent=1 // pred_check
      _
    $region19: #{tpu_custom_call.1} parent=1 // pred_check_branch
      %53 = sbr.rel (0) target = $region21
    $region20: #{tpu_custom_call.1} parent=1 // pred_region
      _
    $region21: #{tpu_custom_call.1} parent=1 // pred_fallthru
      _
    // Predicated region
    $region22: #{tpu_custom_call.1} parent=1 // pred_check
      _
    $region23: #{tpu_custom_call.1} parent=1 // pred_check_branch
      %55 = sbr.rel (0) target = $region25
    $region24: #{tpu_custom_call.1} parent=1 // pred_region
      %s57 = ssub.s32 2048, 2048
      %58 = vsyncadd [#allocation9], %s57
      %s59 = sshll.u32 [#allocation8], 4
      %s60 = int_to_ptr.vmem [resolvable:$true] %s59
      %65 = dma.hbm_to_vmem [thread:$0]  %s5, 2048, %s60, [#allocation9], 128, 128, 8
    $region25: #{tpu_custom_call.1} parent=1 // pred_fallthru
      _
    // Predicated region
    $region26: #{tpu_custom_call.1} parent=1 // pred_check
      _
    $region27: #{tpu_custom_call.1} parent=1 // pred_check_branch
      %67 = sbr.rel (0) target = $region29
    $region28: #{tpu_custom_call.1} parent=1 // pred_region
      _
    $region29: #{tpu_custom_call.1} parent=1 // pred_fallthru
      _
    // Predicated region
    $region30: #{tpu_custom_call.1} parent=1 // pred_check
      _
    $region31: #{tpu_custom_call.1} parent=1 // pred_check_branch
      %69 = sbr.rel (0) target = $region33
    $region32: #{tpu_custom_call.1} parent=1 // pred_region
      %70 = dma.done [#allocation3], 128
    $region33: #{tpu_custom_call.1} parent=1 // pred_fallthru
      _
    // Predicated region
    $region34: #{tpu_custom_call.1} parent=1 // pred_check
      _
    $region35: #{tpu_custom_call.1} parent=1 // pred_check_branch
      %72 = sbr.rel (0) target = $region37
    $region36: #{tpu_custom_call.1} parent=1 // pred_region
      %73 = dma.done [#allocation6], 512
    $region37: #{tpu_custom_call.1} parent=1 // pred_fallthru
      _
    // Predicated region
    $region38: #{tpu_custom_call.1} parent=1 // pred_check
      _
    $region39: #{tpu_custom_call.1} parent=1 // pred_check_branch
      %75 = sbr.rel (0) target = $region41
    $region40: #{tpu_custom_call.1} parent=1 // pred_region
      %76 = dma.done [#allocation6], 2048
    $region41: #{tpu_custom_call.1} parent=1 // pred_fallthru
      _
    // Predicated region
    $region42: #{tpu_custom_call.1} parent=1 // pred_check
      _
    $region43: #{tpu_custom_call.1} parent=1 // pred_check_branch
      %78 = sbr.rel (0) target = $region45
    $region44: #{tpu_custom_call.1} parent=1 // pred_region
      %79 = dma.done [#allocation9], 2048
    $region45: #{tpu_custom_call.1} parent=1 // pred_fallthru
      _
    %v80 = vld [vmem:[#allocation2] sm:$0xff]
    %v81 = vld [vmem:[#allocation5] sm:$0xff]
    %v82 = vld [vmem:[#allocation5 + $0x8] sm:$0xff]
    %v83 = vld [vmem:[#allocation5 + $0x10] sm:$0xff]
    %v84 = vld [vmem:[#allocation5 + $0x18] sm:$0xff]
    %v85 = vld [vmem:[%s2] sm:$0x1]
    %v87 = vlaneseq
    %v88 = vshrl.u32 %v87, 7
    %v89 = vsub.s32 0, %v88
    %v90 = vrot.slane %v85, %v89
    %vm92 = vcmask 261120
    %v94 = vsel %vm92, %v80, 0
    %96 = vmatprep.subr.mxu0 0.0
    %97 = vmatpush1.msra.mxu0 %v81
    %98 = vmatprep.subr.mxu0 0.0
    %99 = vmatpush1.msra.mxu0 %v82
    %100 = vmatprep.subr.mxu0 0.0
    %101 = vmatpush1.msra.mxu0 %v83
    %102 = vmatprep.subr.mxu0 0.0
    %103 = vmatpush1.msra.mxu0 %v84
    %104 = vmatprep.subr.mxu0 0.0
    %105 = vmatpush1.msra.mxu0 0.0
    %106 = vmatprep.subr.mxu0 0.0
    %107 = vmatpush1.msra.mxu0 0.0
    %108 = vmatprep.subr.mxu0 0.0
    %109 = vmatpush1.msra.mxu0 0.0
    %110 = vmatprep.subr.mxu0 0.0
    %111 = vmatpush1.msra.mxu0 0.0
    %112 = vmatprep.subr.mxu0 0.0
    %113 = vmatpush1.msra.mxu0 0.0
    %114 = vmatprep.subr.mxu0 0.0
    %115 = vmatpush1.msra.mxu0 0.0
    %116 = vmatprep.subr.mxu0 0.0
    %117 = vmatpush1.msra.mxu0 0.0
    %118 = vmatprep.subr.mxu0 0.0
    %119 = vmatpush1.msra.mxu0 0.0
    %120 = vmatprep.subr.mxu0 0.0
    %121 = vmatpush1.msra.mxu0 0.0
    %122 = vmatprep.subr.mxu0 0.0
    %123 = vmatpush1.msra.mxu0 0.0
    %124 = vmatprep.subr.mxu0 0.0
    %125 = vmatpush1.msra.mxu0 0.0
    %126 = vmatprep.subr.mxu0 0.0
    %127 = vmatpush1.msra.mxu0 0.0
    %128 = vmatprep.subr.mxu0 0.0
    %129 = vmatpush1.msra.mxu0 0.0
    %130 = vmatprep.subr.mxu0 0.0
    %131 = vmatpush1.msra.mxu0 0.0
    %132 = vmatprep.subr.mxu0 0.0
    %133 = vmatpush1.msra.mxu0 0.0
    %134 = vmatprep.subr.mxu0 0.0
    %135 = vmatpush1.msra.mxu0 0.0
    %136 = vmatprep.subr.mxu0 0.0
    %137 = vmatpush1.msra.mxu0 0.0
    %138 = vmatprep.subr.mxu0 0.0
    %139 = vmatpush1.msra.mxu0 0.0
    %140 = vmatprep.subr.mxu0 0.0
    %141 = vmatpush1.msra.mxu0 0.0
    %142 = vmatprep.subr.mxu0 0.0
    %143 = vmatpush1.msra.mxu0 0.0
    %144 = vmatprep.subr.mxu0 0.0
    %145 = vmatpush1.msra.mxu0 0.0
    %146 = vmatprep.subr.mxu0 0.0
    %147 = vmatpush1.msra.mxu0 0.0
    %148 = vmatprep.subr.mxu0 0.0
    %149 = vmatpush1.msra.mxu0 0.0
    %150 = vmatprep.subr.mxu0 0.0
    %151 = vmatpush1.msra.mxu0 0.0
    %152 = vmatprep.subr.mxu0 0.0
    %153 = vmatpush1.msra.mxu0 0.0
    %154 = vmatprep.subr.mxu0 0.0
    %155 = vmatpush1.msra.mxu0 0.0
    %156 = vmatprep.subr.mxu0 0.0
    %157 = vmatpush1.msra.mxu0 0.0
    %158 = vmatprep.subr.mxu0 0.0
    %159 = vmatpush1.msra.mxu0 0.0
    %160 = vmatprep.mubr.f32.mxu0 0.0
    %161 = vmatmul.mubr.f32.gmra.mrb[0].mxu0 %v94
    %v162 = vpop.f32.mrb[0].mxu0
    %v163 = vadd.f32 %v90, %v162
    %v164 = vpop.f32.mrb[0].mxu0
    %165 = vdwg.mxu0
    %v166 = vmul.f32 %v163, 0.01
    %v167 = vmax.f32 %v163, %v166
    %v168 = vld [vmem:[#allocation7] sm:$0xff]
    %v169 = vld [vmem:[#allocation7 + $0x8] sm:$0xff]
    %v170 = vld [vmem:[#allocation7 + $0x10] sm:$0xff]
    %v171 = vld [vmem:[#allocation7 + $0x18] sm:$0xff]
    %v172 = vld [vmem:[#allocation7 + $0x20] sm:$0xff]
    %v173 = vld [vmem:[#allocation7 + $0x28] sm:$0xff]
    %v174 = vld [vmem:[#allocation7 + $0x30] sm:$0xff]
    %v175 = vld [vmem:[#allocation7 + $0x38] sm:$0xff]
    %v176 = vld [vmem:[#allocation7 + $0x40] sm:$0xff]
    %v177 = vld [vmem:[#allocation7 + $0x48] sm:$0xff]
    %v178 = vld [vmem:[#allocation7 + $0x50] sm:$0xff]
    %v179 = vld [vmem:[#allocation7 + $0x58] sm:$0xff]
    %v180 = vld [vmem:[#allocation7 + $0x60] sm:$0xff]
    %v181 = vld [vmem:[#allocation7 + $0x68] sm:$0xff]
    %v182 = vld [vmem:[#allocation7 + $0x70] sm:$0xff]
    %v183 = vld [vmem:[#allocation7 + $0x78] sm:$0xff]
    %v184 = vld [vmem:[%s4] sm:$0x1]
    %v186 = vlaneseq
    %v187 = vshrl.u32 %v186, 7
    %v188 = vsub.s32 0, %v187
    %v189 = vrot.slane %v184, %v188
    %191 = vmatprep.subr.mxu0 0.0
    %192 = vmatpush1.msra.mxu0 %v168
    %193 = vmatprep.subr.mxu0 0.0
    %194 = vmatpush1.msra.mxu0 %v169
    %195 = vmatprep.subr.mxu0 0.0
    %196 = vmatpush1.msra.mxu0 %v170
    %197 = vmatprep.subr.mxu0 0.0
    %198 = vmatpush1.msra.mxu0 %v171
    %199 = vmatprep.subr.mxu0 0.0
    %200 = vmatpush1.msra.mxu0 %v172
    %201 = vmatprep.subr.mxu0 0.0
    %202 = vmatpush1.msra.mxu0 %v173
    %203 = vmatprep.subr.mxu0 0.0
    %204 = vmatpush1.msra.mxu0 %v174
    %205 = vmatprep.subr.mxu0 0.0
    %206 = vmatpush1.msra.mxu0 %v175
    %207 = vmatprep.subr.mxu0 0.0
    %208 = vmatpush1.msra.mxu0 %v176
    %209 = vmatprep.subr.mxu0 0.0
    %210 = vmatpush1.msra.mxu0 %v177
    %211 = vmatprep.subr.mxu0 0.0
    %212 = vmatpush1.msra.mxu0 %v178
    %213 = vmatprep.subr.mxu0 0.0
    %214 = vmatpush1.msra.mxu0 %v179
    %215 = vmatprep.subr.mxu0 0.0
    %216 = vmatpush1.msra.mxu0 %v180
    %217 = vmatprep.subr.mxu0 0.0
    %218 = vmatpush1.msra.mxu0 %v181
    %219 = vmatprep.subr.mxu0 0.0
    %220 = vmatpush1.msra.mxu0 %v182
    %221 = vmatprep.subr.mxu0 0.0
    %222 = vmatpush1.msra.mxu0 %v183
    %223 = vmatprep.subr.mxu0 0.0
    %224 = vmatpush1.msra.mxu0 0.0
    %225 = vmatprep.subr.mxu0 0.0
    %226 = vmatpush1.msra.mxu0 0.0
    %227 = vmatprep.subr.mxu0 0.0
    %228 = vmatpush1.msra.mxu0 0.0
    %229 = vmatprep.subr.mxu0 0.0
    %230 = vmatpush1.msra.mxu0 0.0
    %231 = vmatprep.subr.mxu0 0.0
    %232 = vmatpush1.msra.mxu0 0.0
    %233 = vmatprep.subr.mxu0 0.0
    %234 = vmatpush1.msra.mxu0 0.0
    %235 = vmatprep.subr.mxu0 0.0
    %236 = vmatpush1.msra.mxu0 0.0
    %237 = vmatprep.subr.mxu0 0.0
    %238 = vmatpush1.msra.mxu0 0.0
    %239 = vmatprep.subr.mxu0 0.0
    %240 = vmatpush1.msra.mxu0 0.0
    %241 = vmatprep.subr.mxu0 0.0
    %242 = vmatpush1.msra.mxu0 0.0
    %243 = vmatprep.subr.mxu0 0.0
    %244 = vmatpush1.msra.mxu0 0.0
    %245 = vmatprep.subr.mxu0 0.0
    %246 = vmatpush1.msra.mxu0 0.0
    %247 = vmatprep.subr.mxu0 0.0
    %248 = vmatpush1.msra.mxu0 0.0
    %249 = vmatprep.subr.mxu0 0.0
    %250 = vmatpush1.msra.mxu0 0.0
    %251 = vmatprep.subr.mxu0 0.0
    %252 = vmatpush1.msra.mxu0 0.0
    %253 = vmatprep.subr.mxu0 0.0
    %254 = vmatpush1.msra.mxu0 0.0
    %255 = vmatprep.mubr.f32.mxu0 0.0
    %256 = vmatmul.mubr.f32.gmra.mrb[0].mxu0 %v167
    %v257 = vpop.f32.mrb[0].mxu0
    %v258 = vadd.f32 %v189, %v257
    %v259 = vpop.f32.mrb[0].mxu0
    %260 = vdwg.mxu0
    %v261 = vmul.f32 %v258, 0.01
    %v262 = vmax.f32 %v258, %v261
    %v263 = vld [vmem:[#allocation8] sm:$0xff]
    %v264 = vld [vmem:[#allocation8 + $0x8] sm:$0xff]
    %v265 = vld [vmem:[#allocation8 + $0x10] sm:$0xff]
    %v266 = vld [vmem:[#allocation8 + $0x18] sm:$0xff]
    %v267 = vld [vmem:[#allocation8 + $0x20] sm:$0xff]
    %v268 = vld [vmem:[#allocation8 + $0x28] sm:$0xff]
    %v269 = vld [vmem:[#allocation8 + $0x30] sm:$0xff]
    %v270 = vld [vmem:[#allocation8 + $0x38] sm:$0xff]
    %v271 = vld [vmem:[#allocation8 + $0x40] sm:$0xff]
    %v272 = vld [vmem:[#allocation8 + $0x48] sm:$0xff]
    %v273 = vld [vmem:[#allocation8 + $0x50] sm:$0xff]
    %v274 = vld [vmem:[#allocation8 + $0x58] sm:$0xff]
    %v275 = vld [vmem:[#allocation8 + $0x60] sm:$0xff]
    %v276 = vld [vmem:[#allocation8 + $0x68] sm:$0xff]
    %v277 = vld [vmem:[#allocation8 + $0x70] sm:$0xff]
    %v278 = vld [vmem:[#allocation8 + $0x78] sm:$0xff]
    %v279 = vld [vmem:[%s6] sm:$0x1]
    %v281 = vlaneseq
    %v282 = vshrl.u32 %v281, 7
    %v283 = vsub.s32 0, %v282
    %v284 = vrot.slane %v279, %v283
    %286 = vmatprep.subr.mxu0 0.0
    %287 = vmatpush1.msra.mxu0 %v263
    %288 = vmatprep.subr.mxu0 0.0
    %289 = vmatpush1.msra.mxu0 %v264
    %290 = vmatprep.subr.mxu0 0.0
    %291 = vmatpush1.msra.mxu0 %v265
    %292 = vmatprep.subr.mxu0 0.0
    %293 = vmatpush1.msra.mxu0 %v266
    %294 = vmatprep.subr.mxu0 0.0
    %295 = vmatpush1.msra.mxu0 %v267
    %296 = vmatprep.subr.mxu0 0.0
    %297 = vmatpush1.msra.mxu0 %v268
    %298 = vmatprep.subr.mxu0 0.0
    %299 = vmatpush1.msra.mxu0 %v269
    %300 = vmatprep.subr.mxu0 0.0
    %301 = vmatpush1.msra.mxu0 %v270
    %302 = vmatprep.subr.mxu0 0.0
    %303 = vmatpush1.msra.mxu0 %v271
    %304 = vmatprep.subr.mxu0 0.0
    %305 = vmatpush1.msra.mxu0 %v272
    %306 = vmatprep.subr.mxu0 0.0
    %307 = vmatpush1.msra.mxu0 %v273
    %308 = vmatprep.subr.mxu0 0.0
    %309 = vmatpush1.msra.mxu0 %v274
    %310 = vmatprep.subr.mxu0 0.0
    %311 = vmatpush1.msra.mxu0 %v275
    %312 = vmatprep.subr.mxu0 0.0
    %313 = vmatpush1.msra.mxu0 %v276
    %314 = vmatprep.subr.mxu0 0.0
    %315 = vmatpush1.msra.mxu0 %v277
    %316 = vmatprep.subr.mxu0 0.0
    %317 = vmatpush1.msra.mxu0 %v278
    %318 = vmatprep.subr.mxu0 0.0
    %319 = vmatpush1.msra.mxu0 0.0
    %320 = vmatprep.subr.mxu0 0.0
    %321 = vmatpush1.msra.mxu0 0.0
    %322 = vmatprep.subr.mxu0 0.0
    %323 = vmatpush1.msra.mxu0 0.0
    %324 = vmatprep.subr.mxu0 0.0
    %325 = vmatpush1.msra.mxu0 0.0
    %326 = vmatprep.subr.mxu0 0.0
    %327 = vmatpush1.msra.mxu0 0.0
    %328 = vmatprep.subr.mxu0 0.0
    %329 = vmatpush1.msra.mxu0 0.0
    %330 = vmatprep.subr.mxu0 0.0
    %331 = vmatpush1.msra.mxu0 0.0
    %332 = vmatprep.subr.mxu0 0.0
    %333 = vmatpush1.msra.mxu0 0.0
    %334 = vmatprep.subr.mxu0 0.0
    %335 = vmatpush1.msra.mxu0 0.0
    %336 = vmatprep.subr.mxu0 0.0
    %337 = vmatpush1.msra.mxu0 0.0
    %338 = vmatprep.subr.mxu0 0.0
    %339 = vmatpush1.msra.mxu0 0.0
    %340 = vmatprep.subr.mxu0 0.0
    %341 = vmatpush1.msra.mxu0 0.0
    %342 = vmatprep.subr.mxu0 0.0
    %343 = vmatpush1.msra.mxu0 0.0
    %344 = vmatprep.subr.mxu0 0.0
    %345 = vmatpush1.msra.mxu0 0.0
    %346 = vmatprep.subr.mxu0 0.0
    %347 = vmatpush1.msra.mxu0 0.0
    %348 = vmatprep.subr.mxu0 0.0
    %349 = vmatpush1.msra.mxu0 0.0
    %350 = vmatprep.mubr.f32.mxu0 0.0
    %351 = vmatmul.mubr.f32.gmra.mrb[0].mxu0 %v262
    %v352 = vpop.f32.mrb[0].mxu0
    %v353 = vadd.f32 %v284, %v352
    %v354 = vpop.f32.mrb[0].mxu0
    %355 = vdwg.mxu0
    %356 = vst [vmem:[#allocation10] sm:$0xff] %v353
    // Predicated region
    $region46: #{tpu_custom_call.1} parent=1 // pred_check
      _
    $region47: #{tpu_custom_call.1} parent=1 // pred_check_branch
      %358 = sbr.rel (0) target = $region49
    $region48: #{tpu_custom_call.1} parent=1 // pred_region
      %s360 = ssub.s32 128, 128
      %361 = vsyncadd [#allocation4], %s360
      %s363 = sshll.u32 [#allocation10], 4
      %s364 = int_to_ptr.vmem [resolvable:$true] %s363
      %366 = dma.vmem_to_hbm [thread:$0]  %s364, 128, %s7, [#allocation4]
    $region49: #{tpu_custom_call.1} parent=1 // pred_fallthru
      _
    // Predicated region
    $region50: #{tpu_custom_call.1} parent=1 // pred_check
      _
    $region51: #{tpu_custom_call.1} parent=1 // pred_check_branch
      %368 = sbr.rel (0) target = $region53
    $region52: #{tpu_custom_call.1} parent=1 // pred_region
      %369 = dma.done [#allocation4], 128
    $region53: #{tpu_custom_call.1} parent=1 // pred_fallthru
      _
    %370 = vsyncpa [#allocation3], 1
    %371 = vsyncpa [#allocation6], 1
    %372 = vsyncpa [#allocation9], 1
    %373 = vsyncpa [#allocation4], 1

</llo_original>
